<compile_context>
chip_gen: v7x
topology: tpu7x:2x2x1
jax: 0.10.0
libtpu: 0.0.40
codegen_flags: <defaults>
</compile_context>

<pallas_src>
import functools

import jax
import jax.numpy as jnp
from jax import lax
from jax.experimental import pallas as pl
from jax.experimental.pallas import tpu as pltpu


def _round_up(x, m):
    return ((x + m - 1) // m) * m


# ----------------------------------------------------------------------------
# Pallas kernel: fused (W_scaled @ patches^T) + bias + ReLU
# ----------------------------------------------------------------------------
def _matmul_bias_relu_kernel(x_ref, w_ref, bias_ref, o_ref):
    # x_ref:    (tm, K)    bf16 im2col patch tile
    # w_ref:    (Cout, K)  bf16 conv weight with BN scale already folded in
    # bias_ref: (Cout, 1)  f32  folded BN bias
    # o_ref:    (Cout, tm) f32  transposed output tile (lane-dense store)
    acc = lax.dot_general(
        x_ref[...], w_ref[...],
        dimension_numbers=(((), ()), ((), ())),  # placeholder (overwritten below)
    ) if False else lax.dot_general(
        w_ref[...], x_ref[...],
        dimension_numbers=(((1,), (1,)), ((), ())),   # contract K with K: A @ B^T
        preferred_element_type=jnp.float32,           # bf16 in, f32 accumulate
    )                                                  # -> (Cout, tm)
    y = acc + bias_ref[...]                            # f32 epilogue (v5e-safe)
    o_ref[...] = jnp.maximum(y, 0.0).astype(o_ref.dtype)


def _fused_matmul_bias_relu(patches, w_t, bias, *, tm=1024):
    """patches: (M, K) bf16, w_t: (Cout, K) bf16, bias: (Cout,) f32.

    Returns out^T of shape (Cout, M) in float32.
    """
    M, K = patches.shape
    Cout = w_t.shape[0]

    # Big M tile (sublane-aligned); partial last block handled by masking,
    # so no padded copy of the patch matrix is ever materialized.
    tm = min(tm, _round_up(M, 8))
    grid_m = pl.cdiv(M, tm)

    bias2 = bias.reshape(Cout, 1).astype(jnp.float32)

    cost = pl.CostEstimate(
        flops=2 * M * K * Cout,
        transcendentals=0,
        bytes_accessed=(M * K * patches.dtype.itemsize
                        + Cout * K * w_t.dtype.itemsize
                        + Cout * 4
                        + Cout * M * 4),
    )

    return pl.pallas_call(
        _matmul_bias_relu_kernel,
        out_shape=jax.ShapeDtypeStruct((Cout, M), jnp.float32),
        grid_spec=pltpu.PrefetchScalarGridSpec(
            num_scalar_prefetch=0,
            grid=(grid_m,),
            in_specs=[
                pl.BlockSpec((tm, K), lambda i: (i, 0)),     # patch tile
                pl.BlockSpec((Cout, K), lambda i: (0, 0)),   # full scaled weight
                pl.BlockSpec((Cout, 1), lambda i: (0, 0)),   # BN bias
            ],
            out_specs=pl.BlockSpec((Cout, tm), lambda i: (0, i)),  # lane-dense
        ),
        compiler_params=pltpu.CompilerParams(
            dimension_semantics=("parallel",),       # shards over v7x's 2 TCs
            vmem_limit_bytes=32 * 1024 * 1024,       # explicit; safe on v5e-v7x
        ),
        cost_estimate=cost,
    )(patches, w_t, bias2)


# ----------------------------------------------------------------------------
# Glue: im2col in plain JAX (pure data movement / reshapes), done in bf16.
# ----------------------------------------------------------------------------
def _im2col_nhwc(x_nhwc, k, s, p):
    N, H, W, C = x_nhwc.shape
    xp = jnp.pad(x_nhwc, ((0, 0), (p, p), (p, p), (0, 0)))
    Ho = (H + 2 * p - k) // s + 1
    Wo = (W + 2 * p - k) // s + 1
    cols = []
    for di in range(k):
        for dj in range(k):
            cols.append(xp[:, di:di + s * Ho:s, dj:dj + s * Wo:s, :])
    patches = jnp.concatenate(cols, axis=-1)          # (N, Ho, Wo, k*k*C)
    return patches.reshape(N * Ho * Wo, k * k * C), Ho, Wo


# ----------------------------------------------------------------------------
# Module-level wrapper, matching torch Conv.forward semantics.
# ----------------------------------------------------------------------------
@functools.partial(jax.jit, static_argnames=("k", "s"))
def conv_forward(x_nchw, weight_oikk, gamma, beta, run_mean, run_var, *, k, s):
    """x_nchw: (N, Cin, H, W); weight_oikk: (Cout, Cin, k, k) (torch layout).

    Returns (N, Cout, Ho, Wo) float32, matching
    relu(batchnorm_eval(conv2d(x, w, stride=s, pad=(k-1)//2, bias=False))).
    """
    eps = 0.001
    N, Cin, H, W = x_nchw.shape
    Cout = weight_oikk.shape[0]
    p = (k - 1) // 2

    # Fold eval-mode BatchNorm: scale goes into the weight, bias stays.
    scale = gamma / jnp.sqrt(run_var + eps)                  # (Cout,)
    bias = beta - run_mean * scale                           # (Cout,)

    # Conv weight (Cout, Cin, kh, kw) -> (Cout, kh*kw*Cin) with K ordered
    # (di, dj, cin) to match the patch ordering below; BN scale folded in.
    w_t = jnp.transpose(weight_oikk, (0, 2, 3, 1)).reshape(Cout, k * k * Cin)
    w_t = (w_t.astype(jnp.float32) * scale[:, None]).astype(jnp.bfloat16)

    # NCHW -> NHWC in bf16 (halves the HBM footprint of the patch matrix).
    x_nhwc = jnp.transpose(x_nchw, (0, 2, 3, 1)).astype(jnp.bfloat16)
    patches, Ho, Wo = _im2col_nhwc(x_nhwc, k, s, p)          # (M, K) bf16

    out_t = _fused_matmul_bias_relu(patches, w_t, bias)      # (Cout, M) f32

    # (Cout, N*Ho*Wo) -> (N, Cout, Ho, Wo)  (NCHW, like the torch module)
    return jnp.transpose(out_t.reshape(Cout, N, Ho, Wo), (1, 0, 2, 3))


# ----------------------------------------------------------------------------
# Pure-JAX f32 reference (correctness sanity check only).
# ----------------------------------------------------------------------------
def conv_forward_ref(x_nchw, weight, gamma, beta, run_mean, run_var, *, k, s):
    eps = 0.001
    p = (k - 1) // 2
    y = lax.conv_general_dilated(
        x_nchw.astype(jnp.float32), weight.astype(jnp.float32),
        window_strides=(s, s), padding=((p, p), (p, p)),
        dimension_numbers=("NCHW", "OIHW", "NCHW"))
    scale = (gamma / jnp.sqrt(run_var + eps)).reshape(1, -1, 1, 1)
    bias = (beta - run_mean * gamma / jnp.sqrt(run_var + eps)).reshape(1, -1, 1, 1)
    return jnp.maximum(y * scale + bias, 0.0)


if __name__ == "__main__":
    # Module config: Conv(in_ch=4, out_ch=8, activation=ReLU, k=3, s=1, g=1)
    in_ch, out_ch, k, s = 4, 8, 3, 1
    N, H, W = 2, 16, 16

    key = jax.random.PRNGKey(0)
    kx, kw, kg, kb, km, kv = jax.random.split(key, 6)

    x = jax.random.normal(kx, (N, in_ch, H, W), dtype=jnp.float32)
    weight = jax.random.normal(kw, (out_ch, in_ch, k, k), dtype=jnp.float32) * 0.1
    gamma = jax.random.normal(kg, (out_ch,), dtype=jnp.float32) * 0.1 + 1.0
    beta = jax.random.normal(kb, (out_ch,), dtype=jnp.float32) * 0.1
    run_mean = jax.random.normal(km, (out_ch,), dtype=jnp.float32) * 0.1
    run_var = jax.random.uniform(kv, (out_ch,), dtype=jnp.float32,
                                 minval=0.5, maxval=1.5)

    out = conv_forward(x, weight, gamma, beta, run_mean, run_var, k=k, s=s)
    out = jax.block_until_ready(out)

    ref = conv_forward_ref(x, weight, gamma, beta, run_mean, run_var, k=k, s=s)
    assert out.shape == (N, out_ch, H, W), out.shape
    # bf16 matmul operands (f32 accumulation) -> compare with a bf16-level
    # tolerance against the pure-f32 reference.
    assert jnp.allclose(out, ref, atol=3e-2, rtol=3e-2), (
        "mismatch vs reference: max abs diff = %f"
        % float(jnp.max(jnp.abs(out - ref))))

    print("KERNEL_OK")
</pallas_src>

<mosaic_0001>
module attributes {stable_mosaic.version = 11 : i64} {
  func.func @_matmul_bias_relu_kernel(%arg0: i32, %arg1: memref<512x36xbf16, #tpu.memory_space<vmem>>, %arg2: memref<8x36xbf16, #tpu.memory_space<vmem>>, %arg3: memref<8x1xf32, #tpu.memory_space<vmem>>, %arg4: memref<8x512xf32, #tpu.memory_space<vmem>>) attributes {dimension_semantics = [#tpu.dimension_semantics<parallel>], iteration_bounds = array<i64: 1>, scalar_prefetch = 0 : i64, scratch_operands = 0 : i64, tpu.core_type = #tpu.core_type<tc>, window_params = [{transform_indices = @transform_0, window_bounds = array<i64: 512, 36>}, {pipeline_mode = #tpu.pipeline_mode<synchronous>, transform_indices = @transform_1, window_bounds = array<i64: 8, 36>}, {pipeline_mode = #tpu.pipeline_mode<synchronous>, transform_indices = @transform_2, window_bounds = array<i64: 8, 1>}, {transform_indices = @transform_3, window_bounds = array<i64: 8, 512>}]} {
    %c0 = arith.constant 0 : index
    %c0_0 = arith.constant 0 : index
    %0 = vector.load %arg2[%c0, %c0_0] : memref<8x36xbf16, #tpu.memory_space<vmem>>, vector<8x36xbf16>
    %c0_1 = arith.constant 0 : index
    %c0_2 = arith.constant 0 : index
    %1 = vector.load %arg1[%c0_1, %c0_2] : memref<512x36xbf16, #tpu.memory_space<vmem>>, vector<512x36xbf16>
    %cst = arith.constant dense<0.000000e+00> : vector<8x512xf32>
    %2 = tpu.matmul %0, %1, %cst {dimension_numbers = #tpu.dot_dimension_numbers<[1], [1], [0], [0], [0, 0, 1, 0], [], []>} : vector<8x36xbf16>, vector<512x36xbf16>, vector<8x512xf32> -> vector<8x512xf32>
    %c0_3 = arith.constant 0 : index
    %c0_4 = arith.constant 0 : index
    %3 = vector.load %arg3[%c0_3, %c0_4] : memref<8x1xf32, #tpu.memory_space<vmem>>, vector<8x1xf32>
    %4 = vector.broadcast %3 : vector<8x1xf32> to vector<8x512xf32>
    %5 = arith.addf %2, %4 : vector<8x512xf32>
    %cst_5 = arith.constant 0.000000e+00 : f32
    %6 = vector.broadcast %cst_5 : f32 to vector<8x512xf32>
    %7 = arith.maximumf %5, %6 : vector<8x512xf32>
    %c0_6 = arith.constant 0 : index
    %c0_7 = arith.constant 0 : index
    %8 = vector.load %arg4[%c0_6, %c0_7] : memref<8x512xf32, #tpu.memory_space<vmem>>, vector<8x512xf32>
    tpu.vector_store %arg4[%c0_6, %c0_7], %7 {strides = array<i32>} : memref<8x512xf32, #tpu.memory_space<vmem>>, vector<8x512xf32>,
    return
  }
  func.func @transform_0(%arg0: i32) -> (i32, i32) {
    %c0_i32 = arith.constant 0 : i32
    %c0_i32_0 = arith.constant 0 : i32
    return %arg0, %c0_i32 : i32, i32
  }
  func.func @transform_1(%arg0: i32) -> (i32, i32) {
    %c0_i32 = arith.constant 0 : i32
    %c0_i32_0 = arith.constant 0 : i32
    %c0_i32_1 = arith.constant 0 : i32
    return %c0_i32, %c0_i32_0 : i32, i32
  }
  func.func @transform_2(%arg0: i32) -> (i32, i32) {
    %c0_i32 = arith.constant 0 : i32
    %c0_i32_0 = arith.constant 0 : i32
    %c0_i32_1 = arith.constant 0 : i32
    return %c0_i32, %c0_i32_0 : i32, i32
  }
  func.func @transform_3(%arg0: i32) -> (i32, i32) {
    %c0_i32 = arith.constant 0 : i32
    %c0_i32_0 = arith.constant 0 : i32
    return %c0_i32, %arg0 : i32, i32
  }
}

</mosaic_0001>

<llo_original>
// kernel: conv_forward.1
$region0: #{conv_forward.1}
  #allocation0 [shape = 'u32[]', space=smem, size = 0x4, offset = 0x4, fixed_abs, tag = 'smem constant byte address 0x4 - core index']
  #allocation1 [shape = 'u32[144,128]{1,0:T(1,128)}', space=vmem, size = 0x12000, scoped, tag = 'internal scratch']
  %s0 = inlined_call_operand.vmem [shape: bf16[512,36], index: 0, kind: input, shape index: {}]
  %s1 = inlined_call_operand.vmem [shape: bf16[8,36], index: 1, kind: input, shape index: {}]
  %s2 = inlined_call_operand.vmem [shape: f32[8,1], index: 2, kind: input, shape index: {}]
  %s3 = inlined_call_operand.vmem [shape: f32[8,512], index: 3, kind: output, shape index: {}]
  %s4 = sld [smem:[#allocation0]]
  $region22: #{conv_forward.1} parent=0
    _
  %s6 = ssub.s32 1, %s4
  %s7 = scalar_select 0, %s6, %s4
  // Predicated region
  $region2: #{conv_forward.1} parent=0 // pred_check
    _
  $region3: #{conv_forward.1} parent=0 // pred_check_branch
    %9 = sbr.rel (0) target = $region5
  $region4: #{conv_forward.1} parent=0 // pred_region
    _
  $region5: #{conv_forward.1} parent=0 // pred_fallthru
    _
  // Predicated region
  $region6: #{conv_forward.1} parent=0 // pred_check
    _
  $region7: #{conv_forward.1} parent=0 // pred_check_branch
    %11 = sbr.rel (0) target = $region9
  $region8: #{conv_forward.1} parent=0 // pred_region
    _
  $region9: #{conv_forward.1} parent=0 // pred_fallthru
    _
  // Predicated region
  $region10: #{conv_forward.1} parent=0 // pred_check
    _
  $region11: #{conv_forward.1} parent=0 // pred_check_branch
    %13 = sbr.rel (0) target = $region13
  $region12: #{conv_forward.1} parent=0 // pred_region
    _
  $region13: #{conv_forward.1} parent=0 // pred_fallthru
    _
  %v15 = vld [vmem:[%s1] sm:$0xf]
  %v16 = vld [vmem:[%s0] sm:$0xf]
  %v17 = vld [vmem:[%s0 + $0x4] sm:$0xf]
  %v18 = vld [vmem:[%s0 + $0x8] sm:$0xf]
  %v19 = vld [vmem:[%s0 + $0xc] sm:$0xf]
  %v20 = vld [vmem:[%s0 + $0x10] sm:$0xf]
  %v21 = vld [vmem:[%s0 + $0x14] sm:$0xf]
  %v22 = vld [vmem:[%s0 + $0x18] sm:$0xf]
  %v23 = vld [vmem:[%s0 + $0x1c] sm:$0xf]
  %v24 = vld [vmem:[%s0 + $0x20] sm:$0xf]
  %v25 = vld [vmem:[%s0 + $0x24] sm:$0xf]
  %v26 = vld [vmem:[%s0 + $0x28] sm:$0xf]
  %v27 = vld [vmem:[%s0 + $0x2c] sm:$0xf]
  %v28 = vld [vmem:[%s0 + $0x30] sm:$0xf]
  %v29 = vld [vmem:[%s0 + $0x34] sm:$0xf]
  %v30 = vld [vmem:[%s0 + $0x38] sm:$0xf]
  %v31 = vld [vmem:[%s0 + $0x3c] sm:$0xf]
  %v32 = vld [vmem:[%s0 + $0x40] sm:$0xf]
  %v33 = vld [vmem:[%s0 + $0x44] sm:$0xf]
  %v34 = vld [vmem:[%s0 + $0x48] sm:$0xf]
  %v35 = vld [vmem:[%s0 + $0x4c] sm:$0xf]
  %v36 = vld [vmem:[%s0 + $0x50] sm:$0xf]
  %v37 = vld [vmem:[%s0 + $0x54] sm:$0xf]
  %v38 = vld [vmem:[%s0 + $0x58] sm:$0xf]
  %v39 = vld [vmem:[%s0 + $0x5c] sm:$0xf]
  %v40 = vld [vmem:[%s0 + $0x60] sm:$0xf]
  %v41 = vld [vmem:[%s0 + $0x64] sm:$0xf]
  %v42 = vld [vmem:[%s0 + $0x68] sm:$0xf]
  %v43 = vld [vmem:[%s0 + $0x6c] sm:$0xf]
  %v44 = vld [vmem:[%s0 + $0x70] sm:$0xf]
  %v45 = vld [vmem:[%s0 + $0x74] sm:$0xf]
  %v46 = vld [vmem:[%s0 + $0x78] sm:$0xf]
  %v47 = vld [vmem:[%s0 + $0x7c] sm:$0xf]
  %v48 = vld [vmem:[%s0 + $0x80] sm:$0xf]
  %v49 = vld [vmem:[%s0 + $0x84] sm:$0xf]
  %v50 = vld [vmem:[%s0 + $0x88] sm:$0xf]
  %v51 = vld [vmem:[%s0 + $0x8c] sm:$0xf]
  %v52 = vld [vmem:[%s0 + $0x90] sm:$0xf]
  %v53 = vld [vmem:[%s0 + $0x94] sm:$0xf]
  %v54 = vld [vmem:[%s0 + $0x98] sm:$0xf]
  %v55 = vld [vmem:[%s0 + $0x9c] sm:$0xf]
  %v56 = vld [vmem:[%s0 + $0xa0] sm:$0xf]
  %v57 = vld [vmem:[%s0 + $0xa4] sm:$0xf]
  %v58 = vld [vmem:[%s0 + $0xa8] sm:$0xf]
  %v59 = vld [vmem:[%s0 + $0xac] sm:$0xf]
  %v60 = vld [vmem:[%s0 + $0xb0] sm:$0xf]
  %v61 = vld [vmem:[%s0 + $0xb4] sm:$0xf]
  %v62 = vld [vmem:[%s0 + $0xb8] sm:$0xf]
  %v63 = vld [vmem:[%s0 + $0xbc] sm:$0xf]
  %v64 = vld [vmem:[%s0 + $0xc0] sm:$0xf]
  %v65 = vld [vmem:[%s0 + $0xc4] sm:$0xf]
  %v66 = vld [vmem:[%s0 + $0xc8] sm:$0xf]
  %v67 = vld [vmem:[%s0 + $0xcc] sm:$0xf]
  %v68 = vld [vmem:[%s0 + $0xd0] sm:$0xf]
  %v69 = vld [vmem:[%s0 + $0xd4] sm:$0xf]
  %v70 = vld [vmem:[%s0 + $0xd8] sm:$0xf]
  %v71 = vld [vmem:[%s0 + $0xdc] sm:$0xf]
  %v72 = vld [vmem:[%s0 + $0xe0] sm:$0xf]
  %v73 = vld [vmem:[%s0 + $0xe4] sm:$0xf]
  %v74 = vld [vmem:[%s0 + $0xe8] sm:$0xf]
  %v75 = vld [vmem:[%s0 + $0xec] sm:$0xf]
  %v76 = vld [vmem:[%s0 + $0xf0] sm:$0xf]
  %v77 = vld [vmem:[%s0 + $0xf4] sm:$0xf]
  %v78 = vld [vmem:[%s0 + $0xf8] sm:$0xf]
  %v79 = vld [vmem:[%s0 + $0xfc] sm:$0xf]
  %v80 = vld [vmem:[%s2] sm:$0xff]
  %82 = vset.pattern.permute.xlu0 0
  %83 = vperm.xlu0 %82, %v80
  %v84 = vpop.permute.xlu0 %83
  %v150 = vunpack.c.l.b16 %v16
  %v151 = vunpack.c.l.b16 %v17
  %v152 = vunpack.c.l.b16 %v18
  %v153 = vunpack.c.l.b16 %v19
  %v154 = vunpack.c.l.b16 %v20
  %v155 = vunpack.c.l.b16 %v21
  %v156 = vunpack.c.l.b16 %v22
  %v157 = vunpack.c.l.b16 %v23
  %v158 = vunpack.c.l.b16 %v24
  %v159 = vunpack.c.l.b16 %v25
  %v160 = vunpack.c.l.b16 %v26
  %v161 = vunpack.c.l.b16 %v27
  %v162 = vunpack.c.l.b16 %v28
  %v163 = vunpack.c.l.b16 %v29
  %v164 = vunpack.c.l.b16 %v30
  %v165 = vunpack.c.l.b16 %v31
  %v166 = vunpack.c.l.b16 %v32
  %v167 = vunpack.c.l.b16 %v33
  %v168 = vunpack.c.l.b16 %v34
  %v169 = vunpack.c.l.b16 %v35
  %v170 = vunpack.c.l.b16 %v36
  %v171 = vunpack.c.l.b16 %v37
  %v172 = vunpack.c.l.b16 %v38
  %v173 = vunpack.c.l.b16 %v39
  %v174 = vunpack.c.l.b16 %v40
  %v175 = vunpack.c.l.b16 %v41
  %v176 = vunpack.c.l.b16 %v42
  %v177 = vunpack.c.l.b16 %v43
  %v178 = vunpack.c.l.b16 %v44
  %v179 = vunpack.c.l.b16 %v45
  %v180 = vunpack.c.l.b16 %v46
  %v181 = vunpack.c.l.b16 %v47
  %v182 = vunpack.c.l.b16 %v48
  %v183 = vunpack.c.l.b16 %v49
  %v184 = vunpack.c.l.b16 %v50
  %v185 = vunpack.c.l.b16 %v51
  %v186 = vunpack.c.l.b16 %v52
  %v187 = vunpack.c.l.b16 %v53
  %v188 = vunpack.c.l.b16 %v54
  %v189 = vunpack.c.l.b16 %v55
  %v190 = vunpack.c.l.b16 %v56
  %v191 = vunpack.c.l.b16 %v57
  %v192 = vunpack.c.l.b16 %v58
  %v193 = vunpack.c.l.b16 %v59
  %v194 = vunpack.c.l.b16 %v60
  %v195 = vunpack.c.l.b16 %v61
  %v196 = vunpack.c.l.b16 %v62
  %v197 = vunpack.c.l.b16 %v63
  %v198 = vunpack.c.l.b16 %v64
  %v199 = vunpack.c.l.b16 %v65
  %v200 = vunpack.c.l.b16 %v66
  %v201 = vunpack.c.l.b16 %v67
  %v202 = vunpack.c.l.b16 %v68
  %v203 = vunpack.c.l.b16 %v69
  %v204 = vunpack.c.l.b16 %v70
  %v205 = vunpack.c.l.b16 %v71
  %v206 = vunpack.c.l.b16 %v72
  %v207 = vunpack.c.l.b16 %v73
  %v208 = vunpack.c.l.b16 %v74
  %v209 = vunpack.c.l.b16 %v75
  %v210 = vunpack.c.l.b16 %v76
  %v211 = vunpack.c.l.b16 %v77
  %v212 = vunpack.c.l.b16 %v78
  %v213 = vunpack.c.l.b16 %v79
  %v214 = vpack.c.b16 %v151, %v150
  %v215 = vpack.c.b16 %v153, %v152
  %v216 = vpack.c.b16 %v155, %v154
  %v217 = vpack.c.b16 %v157, %v156
  %v218 = vpack.c.b16 %v159, %v158
  %v219 = vpack.c.b16 %v161, %v160
  %v220 = vpack.c.b16 %v163, %v162
  %v221 = vpack.c.b16 %v165, %v164
  %v222 = vpack.c.b16 %v167, %v166
  %v223 = vpack.c.b16 %v169, %v168
  %v224 = vpack.c.b16 %v171, %v170
  %v225 = vpack.c.b16 %v173, %v172
  %v226 = vpack.c.b16 %v175, %v174
  %v227 = vpack.c.b16 %v177, %v176
  %v228 = vpack.c.b16 %v179, %v178
  %v229 = vpack.c.b16 %v181, %v180
  %v230 = vpack.c.b16 %v183, %v182
  %v231 = vpack.c.b16 %v185, %v184
  %v232 = vpack.c.b16 %v187, %v186
  %v233 = vpack.c.b16 %v189, %v188
  %v234 = vpack.c.b16 %v191, %v190
  %v235 = vpack.c.b16 %v193, %v192
  %v236 = vpack.c.b16 %v195, %v194
  %v237 = vpack.c.b16 %v197, %v196
  %v238 = vpack.c.b16 %v199, %v198
  %v239 = vpack.c.b16 %v201, %v200
  %v240 = vpack.c.b16 %v203, %v202
  %v241 = vpack.c.b16 %v205, %v204
  %v242 = vpack.c.b16 %v207, %v206
  %v243 = vpack.c.b16 %v209, %v208
  %v244 = vpack.c.b16 %v211, %v210
  %v245 = vpack.c.b16 %v213, %v212
  %vm246 = vcmask 293888
  %v248 = vsel %vm246, %v15, 0
  %v251 = vsel %vm246, %v214, 0
  %v254 = vsel %vm246, %v215, 0
  %v257 = vsel %vm246, %v216, 0
  %v260 = vsel %vm246, %v217, 0
  %v263 = vsel %vm246, %v218, 0
  %v266 = vsel %vm246, %v219, 0
  %v269 = vsel %vm246, %v220, 0
  %v272 = vsel %vm246, %v221, 0
  %v275 = vsel %vm246, %v222, 0
  %v278 = vsel %vm246, %v223, 0
  %v281 = vsel %vm246, %v224, 0
  %v284 = vsel %vm246, %v225, 0
  %v287 = vsel %vm246, %v226, 0
  %v290 = vsel %vm246, %v227, 0
  %v293 = vsel %vm246, %v228, 0
  %v296 = vsel %vm246, %v229, 0
  %v299 = vsel %vm246, %v230, 0
  %v302 = vsel %vm246, %v231, 0
  %v305 = vsel %vm246, %v232, 0
  %v308 = vsel %vm246, %v233, 0
  %v311 = vsel %vm246, %v234, 0
  %v314 = vsel %vm246, %v235, 0
  %v317 = vsel %vm246, %v236, 0
  %v320 = vsel %vm246, %v237, 0
  %v323 = vsel %vm246, %v238, 0
  %v326 = vsel %vm246, %v239, 0
  %v329 = vsel %vm246, %v240, 0
  %v332 = vsel %vm246, %v241, 0
  %v335 = vsel %vm246, %v242, 0
  %v338 = vsel %vm246, %v243, 0
  %v341 = vsel %vm246, %v244, 0
  %v344 = vsel %vm246, %v245, 0
  %346 = vmatprep.subr.bf16.mxu0 0
  %347 = vmatpush1.bf16.xpose.msra.mxu0 %v251
  %348 = vmatprep.subr.bf16.mxu0 0
  %349 = vmatpush1.bf16.xpose.msra.mxu0 %v254
  %350 = vmatprep.subr.bf16.mxu0 0
  %351 = vmatpush1.bf16.xpose.msra.mxu0 %v257
  %352 = vmatprep.subr.bf16.mxu0 0
  %353 = vmatpush1.bf16.xpose.msra.mxu0 %v260
  %354 = vmatprep.subr.bf16.mxu0 0
  %355 = vmatpush1.bf16.xpose.msra.mxu0 %v263
  %356 = vmatprep.subr.bf16.mxu0 0
  %357 = vmatpush1.bf16.xpose.msra.mxu0 %v266
  %358 = vmatprep.subr.bf16.mxu0 0
  %359 = vmatpush1.bf16.xpose.msra.mxu0 %v269
  %360 = vmatprep.subr.bf16.mxu0 0
  %361 = vmatpush1.bf16.xpose.msra.mxu0 %v272
  %362 = vmatprep.subr.bf16.mxu0 0
  %363 = vmatpush1.bf16.xpose.msra.mxu0 %v275
  %364 = vmatprep.subr.bf16.mxu0 0
  %365 = vmatpush1.bf16.xpose.msra.mxu0 %v278
  %366 = vmatprep.subr.bf16.mxu0 0
  %367 = vmatpush1.bf16.xpose.msra.mxu0 %v281
  %368 = vmatprep.subr.bf16.mxu0 0
  %369 = vmatpush1.bf16.xpose.msra.mxu0 %v284
  %370 = vmatprep.subr.bf16.mxu0 0
  %371 = vmatpush1.bf16.xpose.msra.mxu0 %v287
  %372 = vmatprep.subr.bf16.mxu0 0
  %373 = vmatpush1.bf16.xpose.msra.mxu0 %v290
  %374 = vmatprep.subr.bf16.mxu0 0
  %375 = vmatpush1.bf16.xpose.msra.mxu0 %v293
  %376 = vmatprep.subr.bf16.mxu0 0
  %377 = vmatpush1.bf16.xpose.msra.mxu0 %v296
  %378 = vmatprep.mubr.bf16.mxu0 0
  %379 = vmatmul.mubr.bf16.gmra.mrb[0].mxu0 %v248
  %v380 = vpop.f32.mrb[0].mxu0
  %v381 = vadd.f32 %v84, %v380
  %v382 = vpop.f32.mrb[0].mxu0
  %v383 = vadd.f32 %v84, %v382
  %v384 = vpop.f32.mrb[0].mxu0
  %v385 = vpop.f32.mrb[0].mxu0
  %386 = vdwg.mxu0
  %387 = vmatprep.subr.bf16.mxu0 0
  %388 = vmatpush1.bf16.xpose.msra.mxu0 %v299
  %389 = vmatprep.subr.bf16.mxu0 0
  %390 = vmatpush1.bf16.xpose.msra.mxu0 %v302
  %391 = vmatprep.subr.bf16.mxu0 0
  %392 = vmatpush1.bf16.xpose.msra.mxu0 %v305
  %393 = vmatprep.subr.bf16.mxu0 0
  %394 = vmatpush1.bf16.xpose.msra.mxu0 %v308
  %395 = vmatprep.subr.bf16.mxu0 0
  %396 = vmatpush1.bf16.xpose.msra.mxu0 %v311
  %397 = vmatprep.subr.bf16.mxu0 0
  %398 = vmatpush1.bf16.xpose.msra.mxu0 %v314
  %399 = vmatprep.subr.bf16.mxu0 0
  %400 = vmatpush1.bf16.xpose.msra.mxu0 %v317
  %401 = vmatprep.subr.bf16.mxu0 0
  %402 = vmatpush1.bf16.xpose.msra.mxu0 %v320
  %403 = vmatprep.subr.bf16.mxu0 0
  %404 = vmatpush1.bf16.xpose.msra.mxu0 %v323
  %405 = vmatprep.subr.bf16.mxu0 0
  %406 = vmatpush1.bf16.xpose.msra.mxu0 %v326
  %407 = vmatprep.subr.bf16.mxu0 0
  %408 = vmatpush1.bf16.xpose.msra.mxu0 %v329
  %409 = vmatprep.subr.bf16.mxu0 0
  %410 = vmatpush1.bf16.xpose.msra.mxu0 %v332
  %411 = vmatprep.subr.bf16.mxu0 0
  %412 = vmatpush1.bf16.xpose.msra.mxu0 %v335
  %413 = vmatprep.subr.bf16.mxu0 0
  %414 = vmatpush1.bf16.xpose.msra.mxu0 %v338
  %415 = vmatprep.subr.bf16.mxu0 0
  %416 = vmatpush1.bf16.xpose.msra.mxu0 %v341
  %417 = vmatprep.subr.bf16.mxu0 0
  %418 = vmatpush1.bf16.xpose.msra.mxu0 %v344
  %419 = vmatprep.mubr.bf16.mxu0 0
  %420 = vmatmul.mubr.bf16.gmra.mrb[0].mxu0 %v248
  %v421 = vpop.f32.mrb[0].mxu0
  %v422 = vadd.f32 %v84, %v421
  %v423 = vpop.f32.mrb[0].mxu0
  %v424 = vadd.f32 %v84, %v423
  %v425 = vpop.f32.mrb[0].mxu0
  %v426 = vpop.f32.mrb[0].mxu0
  %427 = vdwg.mxu0
  %v428 = vmax.f32 %v381, 0.0
  %v429 = vmax.f32 %v383, 0.0
  %v430 = vmax.f32 %v422, 0.0
  %v431 = vmax.f32 %v424, 0.0
  %432 = vst [vmem:[%s3] sm:$0xff] %v428
  %433 = vst [vmem:[%s3 + $0x8] sm:$0xff] %v429
  %434 = vst [vmem:[%s3 + $0x10] sm:$0xff] %v430
  %435 = vst [vmem:[%s3 + $0x18] sm:$0xff] %v431
  // Predicated region
  $region14: #{conv_forward.1} parent=0 // pred_check
    _
  $region15: #{conv_forward.1} parent=0 // pred_check_branch
    %437 = sbr.rel (0) target = $region17
  $region16: #{conv_forward.1} parent=0 // pred_region
    _
  $region17: #{conv_forward.1} parent=0 // pred_fallthru
    _
  // Predicated region
  $region18: #{conv_forward.1} parent=0 // pred_check
    _
  $region19: #{conv_forward.1} parent=0 // pred_check_branch
    %439 = sbr.rel (0) target = $region21
  $region20: #{conv_forward.1} parent=0 // pred_region
    _
  $region21: #{conv_forward.1} parent=0 // pred_fallthru
    _

</llo_original>
